<compile_context>
chip_gen: v6e
topology: v6e:2x2x1
jax: 0.10.0
libtpu: 0.0.40
codegen_flags: <defaults>
</compile_context>

<pallas_src>
from functools import partial

import jax
import jax.numpy as jnp
from jax import lax
from jax.experimental import pallas as pl
from jax.experimental.pallas import tpu as pltpu


def _round_up(x, m):
    return ((x + m - 1) // m) * m


def _reg_kernel(p_real, tm, bi_ref, bj_ref, meta_ref, pa_ref, pb_ref, out_ref,
                acc_ref):
    """1-D grid over upper-triangular (bi, bj) block pairs of the Gram matrix.

    p_real   : static python int -- number of real (non-padded) prototypes
    tm       : static python int -- block size along the prototype axis
    bi_ref   : SMEM (T,) int32   -- prefetched row-block index per grid step
    bj_ref   : SMEM (T,) int32   -- prefetched col-block index per grid step
    meta_ref : SMEM (4,) f32     -- [l1_coef, ortho_coef, l1_value, 0]
    pa_ref   : VMEM (tm, D) bf16 -- pre-normalized prototype row block bi
    pb_ref   : VMEM (tm, D) bf16 -- pre-normalized prototype row block bj
    out_ref  : SMEM (8,)  f32    -- [total, l1, l1_w, ortho, ortho_w, c_l1, c_ortho, 0]
    acc_ref  : VMEM (8, tm) f32  -- vector accumulator for sum((G - I)^2)
    """
    t = pl.program_id(0)
    nt = pl.num_programs(0)

    @pl.when(t == 0)
    def _init():
        acc_ref[...] = jnp.zeros_like(acc_ref)

    bi = bi_ref[t]
    bj = bj_ref[t]
    is_diag = bi == bj

    # bf16 operands straight from HBM (already row-normalized); contraction on
    # the lane axis of both operands (no transposed RHS materialization).
    gram = lax.dot_general(
        pa_ref[...], pb_ref[...],
        dimension_numbers=(((1,), (1,)), ((), ())),
        preferred_element_type=jnp.float32,
    )                                                      # (tm, tm) f32

    # Subtract the identity only on diagonal blocks and only for real rows
    # (padded rows are exact zeros after normalization, so their Gram entries
    # are already 0 and must NOT pick up a -1 on the diagonal).
    rl = lax.broadcasted_iota(jnp.int32, (tm, tm), 0)
    cl = lax.broadcasted_iota(jnp.int32, (tm, tm), 1)
    on_diag_entry = (rl == cl) & ((bi * tm + rl) < p_real) & is_diag
    diff = gram - jnp.where(on_diag_entry, jnp.float32(1.0), jnp.float32(0.0))
    sq = diff * diff

    # Off-diagonal blocks of the symmetric Gram are visited once -> weight 2.
    w = jnp.where(is_diag, jnp.float32(1.0), jnp.float32(2.0))

    # Pure vreg-wise VPU adds: fold sublane groups into an (8, tm) partial and
    # accumulate; the expensive cross-lane reduce is deferred to the epilogue.
    partial_sum = jnp.sum(sq.reshape(tm // 8, 8, tm), axis=0) * w
    acc_ref[...] = acc_ref[...] + partial_sum

    @pl.when(t == nt - 1)
    def _finalize():
        c_l1 = meta_ref[0]
        c_or = meta_ref[1]
        l1 = meta_ref[2]                     # masked L1 computed in the wrapper

        ortho_sq = jnp.sum(acc_ref[...])     # single full reduce in the epilogue
        ortho = jnp.sqrt(jnp.maximum(ortho_sq, 0.0) + 1e-12)

        l1_w = c_l1 * l1
        or_w = c_or * ortho
        out_ref[0] = l1_w + or_w             # total_loss
        out_ref[1] = l1                      # unweighted l1
        out_ref[2] = l1_w                    # weighted l1
        out_ref[3] = ortho                   # unweighted ortho
        out_ref[4] = or_w                    # weighted ortho
        out_ref[5] = c_l1
        out_ref[6] = c_or
        out_ref[7] = 0.0


@partial(jax.jit, static_argnames=("tile",))
def _lmr_device(proto_flat, last_layer_w, l1_mask, coefs, *, tile=512):
    """Jitted device computation. Returns the (8,) f32 result vector."""
    proto_flat = proto_flat.astype(jnp.float32)
    w = last_layer_w.astype(jnp.float32)
    mask = l1_mask.astype(jnp.float32)
    coefs = coefs.astype(jnp.float32)

    p_count, d = proto_flat.shape

    # masked L1 on the last layer: trivial XLA fusion, no longer in the kernel.
    l1 = jnp.sum(jnp.abs(w * mask))

    # Row-normalize + bf16 cast ONCE (rsqrt -> EUP, then a multiply), instead
    # of per Gram block inside the kernel. Streaming bf16 halves HBM bytes on
    # the dominant (memory-bound) prototype streams.
    p_hat = proto_flat * lax.rsqrt(
        jnp.sum(proto_flat * proto_flat, axis=-1, keepdims=True) + 1e-12)
    p_hat = p_hat.astype(jnp.bfloat16)

    # Gram tile: 512 fills the 256x256 MXU on v6e/v7x and cuts repeated
    # prototype re-reads 4x vs 128; still comfortably inside 64 MiB VMEM (v7x).
    tm = tile if p_count >= tile else _round_up(p_count, 16)
    p_pad = _round_up(p_count, tm)
    if p_pad != p_count:
        p_hat = jnp.pad(p_hat, ((0, p_pad - p_count), (0, 0)))
    n_blk = p_pad // tm

    # Upper-triangular block-pair schedule (Gram symmetry -> ~2x fewer MXU
    # flops / pb DMAs). Row-major order keeps bi constant within a row so the
    # pa block is not re-fetched between consecutive steps.
    pairs = [(i, j) for i in range(n_blk) for j in range(i, n_blk)]
    bi = jnp.asarray([p[0] for p in pairs], dtype=jnp.int32)
    bj = jnp.asarray([p[1] for p in pairs], dtype=jnp.int32)
    n_steps = len(pairs)

    # [l1_coef, ortho_coef, l1_value, 0]
    meta = jnp.concatenate(
        [coefs, jnp.reshape(l1, (1,)), jnp.zeros((1,), jnp.float32)])

    # VMEM budget: 2 bf16 (tm, D) streams double-buffered + (tm, tm) f32 gram
    # temporaries + (8, tm) accumulator. Cap the scoped request at 56 MiB so it
    # leaves headroom inside v7x's 64 MiB physical VMEM.
    vmem_est = 2 * 2 * tm * d * 2 + 4 * tm * tm + 4 * 8 * tm
    vmem_limit = int(min(max(2 * vmem_est, 32 * 1024 * 1024), 56 * 1024 * 1024))

    kernel = partial(_reg_kernel, p_count, tm)

    out = pl.pallas_call(
        kernel,
        out_shape=jax.ShapeDtypeStruct((8,), jnp.float32),
        grid_spec=pltpu.PrefetchScalarGridSpec(
            num_scalar_prefetch=2,              # bi, bj -> SMEM, drive index_maps
            grid=(n_steps,),
            in_specs=[
                pl.BlockSpec((4,), lambda t, bi, bj: (0,),
                             memory_space=pltpu.MemorySpace.SMEM),   # meta
                pl.BlockSpec((tm, d), lambda t, bi, bj: (bi[t], 0)),  # proto blk bi
                pl.BlockSpec((tm, d), lambda t, bi, bj: (bj[t], 0)),  # proto blk bj
            ],
            out_specs=pl.BlockSpec((8,), lambda t, bi, bj: (0,),
                                   memory_space=pltpu.MemorySpace.SMEM),
            scratch_shapes=[pltpu.VMEM((8, tm), jnp.float32)],
        ),
        compiler_params=pltpu.CompilerParams(
            # shared accumulator + last-step finalize -> strictly sequential grid
            dimension_semantics=("arbitrary",),
            vmem_limit_bytes=vmem_limit,
        ),
        cost_estimate=pl.CostEstimate(
            flops=2 * n_steps * tm * tm * d + 4 * n_steps * tm * tm,
            transcendentals=1,
            bytes_accessed=2 * n_steps * tm * d * 2 + p_pad * d * 2 + 8 * 4,
        ),
    )(bi, bj, meta, p_hat, p_hat)
    return out


def linear_model_regularization(proto_flat, last_layer_w, l1_mask, coefs, *,
                                tile=512, sync_report=True):
    """Returns (total_loss, loss_term_dict) mirroring the torch forward.

    proto_flat   : (P, D)  flattened prototypes (NCHW 1x1 spatial squeezed)
    last_layer_w : (C, P)  class-connection weights
    l1_mask      : (C, P)  mask zeroing positive class->prototype connections
    coefs        : (2,)    [l1_coef, ortho_coef]
    sync_report  : if True, ONE device->host transfer builds a python-float
                   report dict (torch .item() semantics); if False the dict
                   holds device scalars and the call never blocks the host.
    """
    out = _lmr_device(proto_flat, last_layer_w, l1_mask, coefs, tile=tile)
    total_loss = out[0]
    if sync_report:
        vals = jax.device_get(out)          # single transfer for all terms
        terms = {
            "l1": float(vals[1]),
            "l1_weighted": float(vals[2]),
            "l1_coef": float(vals[5]),
            "ortho": float(vals[3]),
            "ortho_weighted": float(vals[4]),
            "ortho_coef": float(vals[6]),
        }
    else:
        terms = {
            "l1": out[1],
            "l1_weighted": out[2],
            "l1_coef": out[5],
            "ortho": out[3],
            "ortho_weighted": out[4],
            "ortho_coef": out[6],
        }
    return total_loss, terms


if __name__ == "__main__":
    key = jax.random.PRNGKey(0)
    k1, k2 = jax.random.split(key)

    num_classes = 4
    protos_per_class = 2
    num_prototypes = num_classes * protos_per_class   # P = 8
    proto_dim = 32                                     # D = 32

    # prototypes: NCHW (P, D, 1, 1) -> squeeze spatial -> (P, D)
    prototypes = jax.random.normal(k1, (num_prototypes, proto_dim, 1, 1),
                                   dtype=jnp.float32)
    proto_flat = prototypes.reshape(num_prototypes, proto_dim)

    # last layer: (C, P); l1 mask zeroes the "correct class" connections
    last_layer_w = jax.random.normal(k2, (num_classes, num_prototypes),
                                     dtype=jnp.float32)
    class_identity = jnp.repeat(jnp.eye(num_classes, dtype=jnp.float32),
                                protos_per_class, axis=1)          # (C, P)
    l1_mask = 1.0 - class_identity

    coefs = jnp.array([1e-4, 1e-3], dtype=jnp.float32)  # (l1_coef, ortho_coef)

    total_loss, terms = linear_model_regularization(
        proto_flat, last_layer_w, l1_mask, coefs)
    jax.block_until_ready(total_loss)

    # sanity check against pure-JAX f32 reference (kernel gram is bf16->f32 acc)
    p_hat = proto_flat / jnp.sqrt(
        jnp.sum(proto_flat ** 2, axis=-1, keepdims=True) + 1e-12)
    gram = p_hat @ p_hat.T
    ref_ortho = jnp.sqrt(jnp.sum((gram - jnp.eye(num_prototypes)) ** 2) + 1e-12)
    ref_l1 = jnp.sum(jnp.abs(last_layer_w * l1_mask))
    ref_total = coefs[0] * ref_l1 + coefs[1] * ref_ortho

    assert abs(float(total_loss) - float(ref_total)) < 1e-3, (
        float(total_loss), float(ref_total))
    assert abs(terms["l1"] - float(ref_l1)) < 1e-3, (terms["l1"], float(ref_l1))
    assert abs(terms["ortho"] - float(ref_ortho)) < 5e-2 * max(1.0, float(ref_ortho)), (
        terms["ortho"], float(ref_ortho))

    print("KERNEL_OK")
</pallas_src>

<mosaic_0001>
module attributes {stable_mosaic.version = 11 : i64} {
  func.func @_reg_kernel(%arg0: i32, %arg1: memref<1xi32, #tpu.memory_space<smem>>, %arg2: memref<1xi32, #tpu.memory_space<smem>>, %arg3: memref<4xf32, #tpu.memory_space<smem>>, %arg4: memref<16x32xbf16, #tpu.memory_space<vmem>>, %arg5: memref<16x32xbf16, #tpu.memory_space<vmem>>, %arg6: memref<8xf32, #tpu.memory_space<smem>>, %arg7: memref<8x16xf32, #tpu.memory_space<vmem>>) attributes {dimension_semantics = [#tpu.dimension_semantics<arbitrary>], iteration_bounds = array<i64: 1>, scalar_prefetch = 2 : i64, scratch_operands = 1 : i64, tpu.core_type = #tpu.core_type<tc>, window_params = [{transform_indices = @transform_0, window_bounds = array<i64: 4>}, {transform_indices = @transform_1, window_bounds = array<i64: 16, 32>}, {transform_indices = @transform_2, window_bounds = array<i64: 16, 32>}, {transform_indices = @transform_3, window_bounds = array<i64: 8>}]} {
    %c0_i32 = arith.constant 0 : i32
    %0 = arith.cmpi eq, %arg0, %c0_i32 : i32
    %1 = arith.extui %0 : i1 to i32
    %c0_i32_0 = arith.constant 0 : i32
    %2 = arith.cmpi ne, %1, %c0_i32_0 : i32
    scf.if %2 {
      %cst_15 = arith.constant 0.000000e+00 : f32
      %38 = vector.broadcast %cst_15 : f32 to vector<8x16xf32>
      %c0_16 = arith.constant 0 : index
      %c0_17 = arith.constant 0 : index
      %39 = vector.load %arg7[%c0_16, %c0_17] : memref<8x16xf32, #tpu.memory_space<vmem>>, vector<8x16xf32>
      tpu.vector_store %arg7[%c0_16, %c0_17], %38 {strides = array<i32>} : memref<8x16xf32, #tpu.memory_space<vmem>>, vector<8x16xf32>,
    } else {
    }
    %3 = arith.index_cast %arg0 : i32 to index
    %4 = memref.load %arg1[%3] : memref<1xi32, #tpu.memory_space<smem>>
    %5 = arith.index_cast %arg0 : i32 to index
    %6 = memref.load %arg2[%5] : memref<1xi32, #tpu.memory_space<smem>>
    %7 = arith.cmpi eq, %4, %6 : i32
    %c0 = arith.constant 0 : index
    %c0_1 = arith.constant 0 : index
    %8 = vector.load %arg4[%c0, %c0_1] : memref<16x32xbf16, #tpu.memory_space<vmem>>, vector<16x32xbf16>
    %c0_2 = arith.constant 0 : index
    %c0_3 = arith.constant 0 : index
    %9 = vector.load %arg5[%c0_2, %c0_3] : memref<16x32xbf16, #tpu.memory_space<vmem>>, vector<16x32xbf16>
    %cst = arith.constant dense<0.000000e+00> : vector<16x16xf32>
    %10 = tpu.matmul %8, %9, %cst {dimension_numbers = #tpu.dot_dimension_numbers<[1], [1], [0], [0], [0, 0, 1, 0], [], []>} : vector<16x32xbf16>, vector<16x32xbf16>, vector<16x16xf32> -> vector<16x16xf32>
    %11 = tpu.iota {dimensions = array<i32: 0>} : vector<16x16xi32>
    %12 = tpu.iota {dimensions = array<i32: 1>} : vector<16x16xi32>
    %13 = arith.cmpi eq, %11, %12 : vector<16x16xi32>
    %c16_i32 = arith.constant 16 : i32
    %14 = arith.muli %4, %c16_i32 : i32
    %15 = vector.broadcast %14 : i32 to vector<16x16xi32>
    %16 = arith.addi %15, %11 : vector<16x16xi32>
    %c8_i32 = arith.constant 8 : i32
    %17 = vector.broadcast %c8_i32 : i32 to vector<16x16xi32>
    %18 = arith.cmpi slt, %16, %17 : vector<16x16xi32>
    %19 = arith.andi %13, %18 : vector<16x16xi1>
    %20 = vector.broadcast %7 : i1 to vector<16x16xi1>
    %21 = arith.andi %19, %20 : vector<16x16xi1>
    %cst_4 = arith.constant 1.000000e+00 : f32
    %cst_5 = arith.constant 0.000000e+00 : f32
    %22 = vector.broadcast %cst_4 : f32 to vector<16x16xf32>
    %23 = vector.broadcast %cst_5 : f32 to vector<16x16xf32>
    %24 = arith.select %21, %22, %23 : vector<16x16xi1>, vector<16x16xf32>
    %25 = arith.subf %10, %24 : vector<16x16xf32>
    %26 = arith.mulf %25, %25 : vector<16x16xf32>
    %cst_6 = arith.constant 1.000000e+00 : f32
    %cst_7 = arith.constant 2.000000e+00 : f32
    %27 = arith.select %7, %cst_6, %cst_7 : f32
    %28 = vector.shape_cast %26 : vector<16x16xf32> to vector<2x8x16xf32>
    %cst_8 = arith.constant dense<0.000000e+00> : vector<8x16xf32>
    %29 = vector.multi_reduction <add>, %28, %cst_8 [0] : vector<2x8x16xf32> to vector<8x16xf32>
    %30 = vector.broadcast %27 : f32 to vector<8x16xf32>
    %31 = arith.mulf %29, %30 : vector<8x16xf32>
    %c0_9 = arith.constant 0 : index
    %c0_10 = arith.constant 0 : index
    %32 = vector.load %arg7[%c0_9, %c0_10] : memref<8x16xf32, #tpu.memory_space<vmem>>, vector<8x16xf32>
    %33 = arith.addf %32, %31 : vector<8x16xf32>
    %c0_11 = arith.constant 0 : index
    %c0_12 = arith.constant 0 : index
    %34 = vector.load %arg7[%c0_11, %c0_12] : memref<8x16xf32, #tpu.memory_space<vmem>>, vector<8x16xf32>
    tpu.vector_store %arg7[%c0_11, %c0_12], %33 {strides = array<i32>} : memref<8x16xf32, #tpu.memory_space<vmem>>, vector<8x16xf32>,
    %c0_i32_13 = arith.constant 0 : i32
    %35 = arith.cmpi eq, %arg0, %c0_i32_13 : i32
    %36 = arith.extui %35 : i1 to i32
    %c0_i32_14 = arith.constant 0 : i32
    %37 = arith.cmpi ne, %36, %c0_i32_14 : i32
    scf.if %37 {
      %c0_15 = arith.constant 0 : index
      %38 = memref.load %arg3[%c0_15] : memref<4xf32, #tpu.memory_space<smem>>
      %c1 = arith.constant 1 : index
      %39 = memref.load %arg3[%c1] : memref<4xf32, #tpu.memory_space<smem>>
      %c2 = arith.constant 2 : index
      %40 = memref.load %arg3[%c2] : memref<4xf32, #tpu.memory_space<smem>>
      %c0_16 = arith.constant 0 : index
      %c0_17 = arith.constant 0 : index
      %41 = vector.load %arg7[%c0_16, %c0_17] : memref<8x16xf32, #tpu.memory_space<vmem>>, vector<8x16xf32>
      %42 = vector.shape_cast %41 : vector<8x16xf32> to vector<1x8x16xf32>
      %cst_18 = arith.constant dense<0.000000e+00> : vector<1xf32>
      %43 = vector.multi_reduction <add>, %42, %cst_18 [1, 2] : vector<1x8x16xf32> to vector<1xf32>
      %44 = vector.shape_cast %43 : vector<1xf32> to vector<1x1x1xf32>
      %45 = vector.extract %44[0, 0, 0] : f32 from vector<1x1x1xf32>
      %cst_19 = arith.constant 0.000000e+00 : f32
      %46 = arith.maximumf %45, %cst_19 : f32
      %cst_20 = arith.constant 9.99999996E-13 : f32
      %47 = arith.addf %46, %cst_20 : f32
      %48 = math.sqrt %47 : f32
      %49 = arith.mulf %38, %40 : f32
      %50 = arith.mulf %39, %48 : f32
      %51 = arith.addf %49, %50 : f32
      %c0_21 = arith.constant 0 : index
      %52 = memref.load %arg6[%c0_21] : memref<8xf32, #tpu.memory_space<smem>>
      memref.store %51, %arg6[%c0_21] : memref<8xf32, #tpu.memory_space<smem>>
      %c1_22 = arith.constant 1 : index
      %53 = memref.load %arg6[%c1_22] : memref<8xf32, #tpu.memory_space<smem>>
      memref.store %40, %arg6[%c1_22] : memref<8xf32, #tpu.memory_space<smem>>
      %c2_23 = arith.constant 2 : index
      %54 = memref.load %arg6[%c2_23] : memref<8xf32, #tpu.memory_space<smem>>
      memref.store %49, %arg6[%c2_23] : memref<8xf32, #tpu.memory_space<smem>>
      %c3 = arith.constant 3 : index
      %55 = memref.load %arg6[%c3] : memref<8xf32, #tpu.memory_space<smem>>
      memref.store %48, %arg6[%c3] : memref<8xf32, #tpu.memory_space<smem>>
      %c4 = arith.constant 4 : index
      %56 = memref.load %arg6[%c4] : memref<8xf32, #tpu.memory_space<smem>>
      memref.store %50, %arg6[%c4] : memref<8xf32, #tpu.memory_space<smem>>
      %c5 = arith.constant 5 : index
      %57 = memref.load %arg6[%c5] : memref<8xf32, #tpu.memory_space<smem>>
      memref.store %38, %arg6[%c5] : memref<8xf32, #tpu.memory_space<smem>>
      %c6 = arith.constant 6 : index
      %58 = memref.load %arg6[%c6] : memref<8xf32, #tpu.memory_space<smem>>
      memref.store %39, %arg6[%c6] : memref<8xf32, #tpu.memory_space<smem>>
      %cst_24 = arith.constant 0.000000e+00 : f32
      %c7 = arith.constant 7 : index
      %59 = memref.load %arg6[%c7] : memref<8xf32, #tpu.memory_space<smem>>
      memref.store %cst_24, %arg6[%c7] : memref<8xf32, #tpu.memory_space<smem>>
    } else {
    }
    return
  }
  func.func @transform_0(%arg0: i32, %arg1: memref<1xi32, #tpu.memory_space<smem>>, %arg2: memref<1xi32, #tpu.memory_space<smem>>) -> i32 {
    %c0_i32 = arith.constant 0 : i32
    %c0_i32_0 = arith.constant 0 : i32
    return %c0_i32 : i32
  }
  func.func @transform_1(%arg0: i32, %arg1: memref<1xi32, #tpu.memory_space<smem>>, %arg2: memref<1xi32, #tpu.memory_space<smem>>) -> (i32, i32) {
    %0 = arith.index_cast %arg0 : i32 to index
    %1 = memref.load %arg1[%0] : memref<1xi32, #tpu.memory_space<smem>>
    %c0_i32 = arith.constant 0 : i32
    %c0_i32_0 = arith.constant 0 : i32
    return %1, %c0_i32 : i32, i32
  }
  func.func @transform_2(%arg0: i32, %arg1: memref<1xi32, #tpu.memory_space<smem>>, %arg2: memref<1xi32, #tpu.memory_space<smem>>) -> (i32, i32) {
    %0 = arith.index_cast %arg0 : i32 to index
    %1 = memref.load %arg2[%0] : memref<1xi32, #tpu.memory_space<smem>>
    %c0_i32 = arith.constant 0 : i32
    %c0_i32_0 = arith.constant 0 : i32
    return %1, %c0_i32 : i32, i32
  }
  func.func @transform_3(%arg0: i32, %arg1: memref<1xi32, #tpu.memory_space<smem>>, %arg2: memref<1xi32, #tpu.memory_space<smem>>) -> i32 {
    %c0_i32 = arith.constant 0 : i32
    %c0_i32_0 = arith.constant 0 : i32
    return %c0_i32 : i32
  }
}

</mosaic_0001>

<llo_original>
// kernel: _lmr_device.1
$region0: #{_lmr_device.1}
  #allocation0 [shape = 'u32[]', space=smem, size = 0x4, offset = 0x4, fixed_abs, tag = 'smem constant byte address 0x4 - core index']
  #allocation1 [shape = 'u32[144,128]{1,0:T(1,128)}', space=vmem, size = 0x12000, scoped, tag = 'internal scratch']
  #allocation2 [shape = 'f32[8,16]{1,0:T(8,128)}', space=vmem, size = 0x1000, scoped, tag = 'scratch operand']
  #allocation3 [shape = 's32[1]{0}', space=sflag, size = 0x4, scoped, tag = 'scoped memory for _lmr_device.1']
  #allocation4 [shape = 's32[1]{0:T(128)S(6)}', space=smem, size = 0x200, scoped, tag = 'prefetched SMEM operand 0']
  #allocation5 [shape = 's32[1]{0:T(128)S(6)}', space=smem, size = 0x200, scoped, tag = 'prefetched SMEM operand 1']
  %s0 = inlined_call_operand.<no memory space> [shape: s32[1], index: 0, kind: input, shape index: {}, may-alias: {0,1}]
  %s1 = inlined_call_operand.<no memory space> [shape: s32[1], index: 1, kind: input, shape index: {}, may-alias: {0,1}]
  %s2 = inlined_call_operand.vmem [shape: f32[4], index: 2, kind: input, shape index: {}]
  %s3 = inlined_call_operand.vmem [shape: bf16[16,32], index: 3, kind: input, shape index: {}, may-alias: {3,4}]
  %s4 = inlined_call_operand.vmem [shape: bf16[16,32], index: 4, kind: input, shape index: {}, may-alias: {3,4}]
  %s5 = inlined_call_operand.hbm [shape: f32[8], index: 5, kind: output, shape index: {}]
  %s6 = sld [smem:[#allocation0]]
  $region34: #{_lmr_device.1} parent=0
    _
  %s8 = ssub.s32 1, %s6
  %s9 = scalar_select 0, %s8, %s6
  %10 = sst [smem:[#allocation4]] %s0
  %11 = sst [smem:[#allocation5]] %s1
  $region1: #{_lmr_device.1} parent=0
    #allocation6 [shape = 'u8[512]{0}', space=smem, size = 0x200, scoped, tag = 'input window, operand 2, single buffered']
    #allocation7 [shape = 's32[1]{0}', space=sflag, size = 0x4, scoped, tag = 'scoped memory for _lmr_device.1']
    #allocation8 [shape = 's32[1]{0}', space=sflag, size = 0x4, scoped, tag = 'scoped memory for _lmr_device.1']
    #allocation9 [shape = 'u8[512]{0}', space=smem, size = 0x200, scoped, tag = 'output window, operand 0, single buffered']
    %12 = vsyncpa [#allocation8], 0
    %13 = vsyncpa [#allocation7], 0
    // Predicated region
    $region2: #{_lmr_device.1} parent=1 // pred_check
      _
    $region3: #{_lmr_device.1} parent=1 // pred_check_branch
      %15 = sbr.rel (0) target = $region5
    $region4: #{_lmr_device.1} parent=1 // pred_region
      %s17 = ssub.s32 16, 16
      %18 = vsyncadd [#allocation8], %s17
      %s20 = sshll.u32 %s2, 4
      %s21 = int_to_ptr.vmem [resolvable:$true] %s20
      %23 = dma.vmem_to_smem %s21, 16, [#allocation6], [#allocation8]
    $region5: #{_lmr_device.1} parent=1 // pred_fallthru
      _
    // Predicated region
    $region6: #{_lmr_device.1} parent=1 // pred_check
      _
    $region7: #{_lmr_device.1} parent=1 // pred_check_branch
      %25 = sbr.rel (0) target = $region9
    $region8: #{_lmr_device.1} parent=1 // pred_region
      %s26 = sld [smem:[#allocation4]]
      %s27 = smul.u32 2, %s26
      %p28 = scmp.lt.s32.totalorder %s27, 1
      %s29 = scalar_select %p28, %s27, 1
      %s30 = smul.addr %s29, 4
      %s31 = scalar_lea.vmem %s3, %s30
      %s32 = sld [smem:[#allocation4]]
      %s33 = smul.u32 2, %s32
    $region9: #{_lmr_device.1} parent=1 // pred_fallthru
      _
    // Predicated region
    $region10: #{_lmr_device.1} parent=1 // pred_check
      _
    $region11: #{_lmr_device.1} parent=1 // pred_check_branch
      %35 = sbr.rel (0) target = $region13
    $region12: #{_lmr_device.1} parent=1 // pred_region
      %s36 = sld [smem:[#allocation5]]
      %s37 = smul.u32 2, %s36
      %p38 = scmp.lt.s32.totalorder %s37, 1
      %s39 = scalar_select %p38, %s37, 1
      %s40 = smul.addr %s39, 4
      %s41 = scalar_lea.vmem %s4, %s40
      %s42 = sld [smem:[#allocation5]]
      %s43 = smul.u32 2, %s42
    $region13: #{_lmr_device.1} parent=1 // pred_fallthru
      _
    // Predicated region
    $region14: #{_lmr_device.1} parent=1 // pred_check
      _
    $region15: #{_lmr_device.1} parent=1 // pred_check_branch
      %45 = sbr.rel (0) target = $region17
    $region16: #{_lmr_device.1} parent=1 // pred_region
      %46 = dma.done [#allocation8], 16
    $region17: #{_lmr_device.1} parent=1 // pred_fallthru
      _
    %47 = sfence
    %s48 = sld [smem:[#allocation4]]
    %s49 = smul.u32 2, %s48
    %p50 = scmp.lt.s32.totalorder %s49, 1
    %s51 = scalar_select %p50, %s49, 1
    %s52 = smul.addr %s51, 4
    %s53 = scalar_lea.vmem %s3, %s52
    %s54 = sld [smem:[#allocation5]]
    %s55 = smul.u32 2, %s54
    %p56 = scmp.lt.s32.totalorder %s55, 1
    %s57 = scalar_select %p56, %s55, 1
    %s58 = smul.addr %s57, 4
    %s59 = scalar_lea.vmem %s4, %s58
    %s60 = sld [smem:[#allocation4]]
    %s61 = smul.u32 2, %s60
    %p62 = scmp.lt.s32.totalorder %s61, 1
    %s63 = scalar_select %p62, %s61, 1
    %s64 = smul.addr %s63, 4
    %s65 = scalar_lea.vmem %s3, %s64
    %s66 = sld [smem:[#allocation4]]
    %s67 = smul.u32 2, %s66
    %s68 = sld [smem:[#allocation5]]
    %s69 = smul.u32 2, %s68
    %p70 = scmp.lt.s32.totalorder %s69, 1
    %s71 = scalar_select %p70, %s69, 1
    %s72 = smul.addr %s71, 4
    %s73 = scalar_lea.vmem %s4, %s72
    %s74 = sld [smem:[#allocation5]]
    %s75 = smul.u32 2, %s74
    %p77 = scmp.eq.s32.totalorder 0, 0
    // Predicated region
    $region18: #{_lmr_device.1} parent=1 // pred_check
      %p78 = pneg %p77
    $region19: #{_lmr_device.1} parent=1 // pred_check_branch
      %80 = sbr.rel (%p78) target = $region21
    $region20: #{_lmr_device.1} parent=1 // pred_region
      %vm81 = vcmask 130048
      %82 = vst.msk [vmem:[#allocation2] sm:$0xff] %vm81, 0.0
    $region21: #{_lmr_device.1} parent=1 // pred_fallthru
      _
    %s83 = sld [smem:[#allocation4]]
    %s84 = sld [smem:[#allocation5]]
    %p85 = scmp.eq.s32.totalorder %s83, %s84
    %v86 = vld [vmem:[%s65] sm:$0xf]
    %v87 = vld [vmem:[%s65 + $0x4] sm:$0xf]
    %v88 = vld [vmem:[%s73] sm:$0xf]
    %v89 = vld [vmem:[%s73 + $0x4] sm:$0xf]
    %v92 = vunpack.c.l.b16 %v86
    %v93 = vunpack.c.l.b16 %v87
    %v94 = vpack.c.b16 %v93, %v92
    %v97 = vunpack.c.l.b16 %v88
    %v98 = vunpack.c.l.b16 %v89
    %v99 = vpack.c.b16 %v98, %v97
    %vm100 = vcmask 261120
    %v102 = vsel %vm100, %v94, 0
    %v105 = vsel %vm100, %v99, 0
    %107 = vmatprep.subr.bf16.mxu0 0
    %108 = vmatpush1.bf16.xpose.msra.mxu0 0
    %109 = vmatprep.subr.bf16.mxu0 0
    %110 = vmatpush1.bf16.xpose.msra.mxu0 0
    %111 = vmatprep.subr.bf16.mxu0 0
    %112 = vmatpush1.bf16.xpose.msra.mxu0 0
    %113 = vmatprep.subr.bf16.mxu0 0
    %114 = vmatpush1.bf16.xpose.msra.mxu0 0
    %115 = vmatprep.subr.bf16.mxu0 0
    %116 = vmatpush1.bf16.xpose.msra.mxu0 0
    %117 = vmatprep.subr.bf16.mxu0 0
    %118 = vmatpush1.bf16.xpose.msra.mxu0 0
    %119 = vmatprep.subr.bf16.mxu0 0
    %120 = vmatpush1.bf16.xpose.msra.mxu0 0
    %121 = vmatprep.subr.bf16.mxu0 0
    %122 = vmatpush1.bf16.xpose.msra.mxu0 %v105
    %123 = vmatprep.subr.bf16.mxu0 0
    %124 = vmatpush2.bf16.xpose.msra.mxu0 0
    %125 = vmatprep.subr.bf16.mxu0 0
    %126 = vmatpush2.bf16.xpose.msra.mxu0 0
    %127 = vmatprep.subr.bf16.mxu0 0
    %128 = vmatpush2.bf16.xpose.msra.mxu0 0
    %129 = vmatprep.subr.bf16.mxu0 0
    %130 = vmatpush2.bf16.xpose.msra.mxu0 0
    %131 = vmatprep.subr.bf16.mxu0 0
    %132 = vmatpush2.bf16.xpose.msra.mxu0 0
    %133 = vmatprep.subr.bf16.mxu0 0
    %134 = vmatpush2.bf16.xpose.msra.mxu0 0
    %135 = vmatprep.subr.bf16.mxu0 0
    %136 = vmatpush2.bf16.xpose.msra.mxu0 0
    %137 = vmatprep.subr.bf16.mxu0 0
    %138 = vmatpush2.bf16.xpose.msra.mxu0 0
    %139 = vmatprep.mubr.bf16.mxu0 0
    %140 = vmatmul.mubr.bf16.gmra.mxu0 %v102
    %v141 = vpop.f32.mrf.mxu0
    %v142 = vadd.f32 0.0, %v141
    %v143 = vpop.f32.mrf.mxu0
    %v144 = vpop.f32.mrf.mxu0
    %v145 = vadd.f32 0.0, %v144
    %v146 = vpop.f32.mrf.mxu0
    %147 = vdwg.mxu0
    %v148 = vlaneseq
    %v149 = vshrl.u32 %v148, 7
    %v150 = vadd.s32 %v149, 8
    %v151 = vlaneseq
    %v152 = vand.u32 %v151, 127
    %vm153 = vcmp.eq.s32.totalorder %v149, %v152
    %vm154 = vcmp.eq.s32.totalorder %v150, %v152
    %s155 = smul.u32 %s83, 16
    %v156 = vstv %s155
    %v157 = vadd.s32 %v156, %v149
    %v158 = vadd.s32 %v156, %v150
    %vm159 = vcmp.lt.s32.totalorder %v157, 8
    %vm160 = vcmp.lt.s32.totalorder %v158, 8
    %vm161 = vmand %vm153, %vm159
    %vm162 = vmand %vm154, %vm160
    %s163 = scalar_select %p85, 1, 0
    %v164 = vstv %s163
    %vm165 = vcmp.eq.s32.totalorder %v164, 1
    %vm166 = vmand %vm161, %vm165
    %vm167 = vmand %vm162, %vm165
    %v168 = vsel %vm166, 1.0, 0.0
    %v169 = vsel %vm167, 1.0, 0.0
    %v170 = vsub.f32 %v142, %v168
    %v171 = vsub.f32 %v145, %v169
    %v172 = vmul.f32 %v170, %v170
    %v173 = vmul.f32 %v171, %v171
    %s174 = scalar_select %p85, 1.0, 2.0
    %vm175 = vcmask 130048
    %v176 = vsel %vm175, %v172, 0.0
    %v177 = vsel %vm175, %v173, 0.0
    %v178 = vadd.f32 %v176, %v177
    %v179 = vstv %s174
    %v180 = vmul.f32 %v178, %v179
    %v181 = vld [vmem:[#allocation2] sm:$0xff]
    %v182 = vadd.f32 %v181, %v180
    %183 = vst.msk [vmem:[#allocation2] sm:$0xff] %vm175, %v182
    // Predicated region
    $region22: #{_lmr_device.1} parent=1 // pred_check
      %p184 = pneg %p77
    $region23: #{_lmr_device.1} parent=1 // pred_check_branch
      %186 = sbr.rel (%p184) target = $region25
    $region24: #{_lmr_device.1} parent=1 // pred_region
      %s187 = sld [smem:[#allocation6]]
      %s188 = sld [smem:[#allocation6 + $0x1]]
      %s189 = sld [smem:[#allocation6 + $0x2]]
      %v190 = vld [vmem:[#allocation2] sm:$0xff]
      %v191 = vsel %vm175, %v190, 0.0
      %192 = vadd.xlane.f32.xlu0 %v191
      %v193 = vpop.xlane.xlu0 %192
      %v194 = vrot.slane %v193, 4
      %v195 = vadd.f32 %v193, %v194
      %v196 = vrot.slane %v195, 2
      %v197 = vadd.f32 %v195, %v196
      %v198 = vrot.slane %v197, 1
      %v199 = vadd.f32 %v197, %v198
      %s200 = vtos %v199
      %s201 = smax.f32 %s200, 0.0
      %s202 = sadd.f32 %s201, 1e-12
      %v203 = vstv %s202
      %v204 = vrsqrt.pop %v203
      %v205 = vmul.f32 %v203, %v204
      %vm206 = vcmp.eq.f32.partialorder %v203, inf
      %v207 = vsel %vm206, %v203, %v205
      %vm208 = vcmp.eq.f32.partialorder %v203, 0.0
      %v209 = vand.u32 %v203, 2147483648
      %v210 = vsel %vm208, %v209, %v207
      %s211 = vtos %v210
      %s212 = smul.f32 %s187, %s189
      %s213 = smul.f32 %s188, %s211
      %s214 = sadd.f32 %s212, %s213
      %s215 = scalar_lea.smem [#allocation9], 0
      %216 = sst [smem:[%s215]] %s214
      %s217 = scalar_lea.smem [#allocation9], 1
      %218 = sst [smem:[%s217]] %s189
      %s219 = scalar_lea.smem [#allocation9], 2
      %220 = sst [smem:[%s219]] %s212
      %s221 = scalar_lea.smem [#allocation9], 3
      %222 = sst [smem:[%s221]] %s211
      %s223 = scalar_lea.smem [#allocation9], 4
      %224 = sst [smem:[%s223]] %s213
      %s225 = scalar_lea.smem [#allocation9], 5
      %226 = sst [smem:[%s225]] %s187
      %s227 = scalar_lea.smem [#allocation9], 6
      %228 = sst [smem:[%s227]] %s188
      %s229 = scalar_lea.smem [#allocation9], 7
      %230 = sst [smem:[%s229]] 0.0
    $region25: #{_lmr_device.1} parent=1 // pred_fallthru
      _
    // Predicated region
    $region26: #{_lmr_device.1} parent=1 // pred_check
      _
    $region27: #{_lmr_device.1} parent=1 // pred_check_branch
      %232 = sbr.rel (0) target = $region29
    $region28: #{_lmr_device.1} parent=1 // pred_region
      %s234 = ssub.s32 16, 16
      %235 = vsyncadd [#allocation7], %s234
      %238 = dma.smem_to_hbm [#allocation9], 16, %s5, [#allocation7]
    $region29: #{_lmr_device.1} parent=1 // pred_fallthru
      _
    // Predicated region
    $region30: #{_lmr_device.1} parent=1 // pred_check
      _
    $region31: #{_lmr_device.1} parent=1 // pred_check_branch
      %240 = sbr.rel (0) target = $region33
    $region32: #{_lmr_device.1} parent=1 // pred_region
      %241 = dma.done [#allocation7], 16
    $region33: #{_lmr_device.1} parent=1 // pred_fallthru
      _
    %242 = sfence
    %243 = vsyncpa [#allocation7], 1
    %244 = vsyncpa [#allocation8], 1

</llo_original>
